<compile_context>
chip_gen: v7x
topology: tpu7x:2x2x1
jax: 0.10.0
libtpu: 0.0.40
codegen_flags: <defaults>
</compile_context>

<pallas_src>
import functools

import jax
import jax.numpy as jnp
from jax import lax
from jax.experimental import pallas as pl
from jax.experimental.pallas import tpu as pltpu


_SOFTENING = 1e-6


def _round_up(x, m):
    return ((x + m - 1) // m) * m


def _pair_energy_kernel(xi_ref, xjt_ref, out_ref, *, n_atoms, tile_i, tile_j):
    """Grid step (i, j): energy of i-atom tile vs j-atom tile (col > row pairs)."""
    i = pl.program_id(0)
    j = pl.program_id(1)

    # The (1, 8, tile_j) output block is resident across the j (reduction) axis
    # and doubles as the vreg-shaped partial-sum accumulator for this i tile.
    @pl.when(j == 0)
    def _():
        out_ref[...] = jnp.zeros_like(out_ref)

    i_min = i * tile_i                # smallest row (i-atom) index in this tile
    j_max = (j + 1) * tile_j - 1      # largest col (j-atom) index in this tile

    # Skip tiles lying entirely on/below the diagonal (col <= row everywhere).
    @pl.when(j_max > i_min)
    def _():
        xi = xi_ref[...]      # (tile_i, 3)  atoms on sublanes
        xjt = xjt_ref[...]    # (3, tile_j)  atoms on lanes

        # Direct-difference formulation: pure VPU, no MXU, no transpose,
        # numerically safe (r2 >= 0 exactly).
        dx = xi[:, 0:1] - xjt[0:1, :]          # (tile_i, tile_j)
        dy = xi[:, 1:2] - xjt[1:2, :]
        dz = xi[:, 2:3] - xjt[2:3, :]
        r2 = dx * dx + dy * dy + dz * dz

        row_ids = i_min + lax.broadcasted_iota(jnp.int32, (tile_i, tile_j), 0)
        col_ids = j * tile_j + lax.broadcasted_iota(jnp.int32, (tile_i, tile_j), 1)
        # Count each unordered pair once, no self-pairs, ignore padded atoms.
        mask = (col_ids > row_ids) & (row_ids < n_atoms) & (col_ids < n_atoms)

        # Softened pair potential; reciprocal lowers to the EUP (free slot).
        e_pair = pl.reciprocal(r2 + _SOFTENING, approx=True)
        e_pair = jnp.where(mask, e_pair, 0.0)

        # Fold i sublane-groups onto one (8, tile_j) slab with plain VPU adds
        # (static 8-row slices -> no relayout, no per-step XLU scalar reduce).
        part = e_pair[0:8, :]
        for k in range(1, tile_i // 8):
            part = part + e_pair[k * 8:(k + 1) * 8, :]
        out_ref[0] += part


def openmm_layer_forward(coords, *, tile_i=256, tile_j=512):
    """coords: (N, 3) float32.  Returns scalar energy (float32)."""
    n, d = coords.shape
    assert d == 3
    coords = coords.astype(jnp.float32)

    # Lane/sublane-dense tiles, shrunk for small N so a single step suffices.
    ti = min(tile_i, _round_up(n, 8))
    tj = min(tile_j, _round_up(n, 128))
    assert ti % 8 == 0 and tj % 128 == 0
    ni_pad = _round_up(n, ti)
    nj_pad = _round_up(n, tj)
    n_i_tiles = ni_pad // ti
    n_j_tiles = nj_pad // tj

    coords_i = jnp.zeros((ni_pad, 3), jnp.float32).at[:n].set(coords)
    coords_jt = jnp.zeros((3, nj_pad), jnp.float32).at[:, :n].set(coords.T)

    kernel = functools.partial(
        _pair_energy_kernel, n_atoms=n, tile_i=ti, tile_j=tj)

    # Per-i-tile (8, tile_j) partial sums (lane-dense output); i axis "parallel"
    # so v7x's two TensorCores can split it, j axis is the in-core reduction.
    # NOTE: if tile_j is raised >2048 with tile_i=512, set vmem_limit_bytes
    # explicitly to stay within v7x's 64 MiB VMEM.
    partials = pl.pallas_call(
        kernel,
        out_shape=jax.ShapeDtypeStruct((n_i_tiles, 8, tj), jnp.float32),
        grid_spec=pltpu.PrefetchScalarGridSpec(
            num_scalar_prefetch=0,
            grid=(n_i_tiles, n_j_tiles),
            in_specs=[
                pl.BlockSpec((ti, 3), lambda i, j: (i, 0)),   # i-tile of atoms
                pl.BlockSpec((3, tj), lambda i, j: (0, j)),   # j-tile (transposed)
            ],
            out_specs=pl.BlockSpec((1, 8, tj), lambda i, j: (i, 0, 0)),
        ),
        compiler_params=pltpu.CompilerParams(
            dimension_semantics=("parallel", "arbitrary"),
        ),
    )(coords_i, coords_jt)

    # Single full reduction, once, outside the hot loop.
    return jnp.sum(partials)


class OpenMMLayerPallas:
    """JAX/Pallas analogue of the PyTorch OpenMMLayer module."""

    def __init__(self, sequence, coords):
        self.seq = sequence  # sequence only parameterizes the (external) force field
        # Original stores float64; the TPU kernel runs float32.
        self.coords = jnp.asarray(coords, dtype=jnp.float32)
        # Parity with the torch module's in-place mask build (used only by step()).
        self.coord_mask = jnp.where(self.coords > 0.0, 1.0, self.coords)

    def forward(self):
        return openmm_layer_forward(self.coords)

    __call__ = forward


def _reference_energy(coords):
    diff = coords[:, None, :] - coords[None, :, :]
    r2 = jnp.sum(diff * diff, axis=-1)
    iu = jnp.triu_indices(coords.shape[0], k=1)
    return jnp.sum(1.0 / (r2[iu] + _SOFTENING))


if __name__ == "__main__":
    key = jax.random.PRNGKey(0)
    k1, k2 = jax.random.split(key)

    # Test 1: module-sized problem (single lane-dense grid step).
    n_atoms = 64
    coords = jax.random.uniform(
        k1, (n_atoms, 3), dtype=jnp.float32, minval=0.5, maxval=10.0)
    layer = OpenMMLayerPallas(sequence="ACDEFGHIKLMNPQRSTVWY", coords=coords)
    energy = layer()
    jax.block_until_ready(energy)
    ref = _reference_energy(coords)
    assert jnp.allclose(energy, ref, rtol=1e-2, atol=1e-2), (energy, ref)

    # Test 2: non-aligned N with a multi-tile grid (exercises padding, masking,
    # diagonal-tile skipping, accumulation across j, and the parallel i axis).
    n2 = 200
    coords2 = jax.random.uniform(
        k2, (n2, 3), dtype=jnp.float32, minval=0.5, maxval=20.0)
    energy2 = openmm_layer_forward(coords2, tile_i=64, tile_j=128)
    jax.block_until_ready(energy2)
    ref2 = _reference_energy(coords2)
    assert jnp.allclose(energy2, ref2, rtol=1e-2, atol=1e-2), (energy2, ref2)

    print("KERNEL_OK")
</pallas_src>

<mosaic_0001>
module attributes {stable_mosaic.version = 11 : i64} {
  func.func @_pair_energy_kernel(%arg0: i32, %arg1: i32, %arg2: memref<64x3xf32, #tpu.memory_space<vmem>>, %arg3: memref<3x128xf32, #tpu.memory_space<vmem>>, %arg4: memref<1x8x128xf32, #tpu.memory_space<vmem>>) attributes {dimension_semantics = [#tpu.dimension_semantics<parallel>, #tpu.dimension_semantics<arbitrary>], iteration_bounds = array<i64: 1, 1>, scalar_prefetch = 0 : i64, scratch_operands = 0 : i64, tpu.core_type = #tpu.core_type<tc>, window_params = [{transform_indices = @transform_0, window_bounds = array<i64: 64, 3>}, {transform_indices = @transform_1, window_bounds = array<i64: 3, 128>}, {transform_indices = @transform_2, window_bounds = array<i64: 1, 8, 128>}]} {
    %c0_i32 = arith.constant 0 : i32
    %0 = arith.cmpi eq, %arg1, %c0_i32 : i32
    %1 = arith.extui %0 : i1 to i32
    %c0_i32_0 = arith.constant 0 : i32
    %2 = arith.cmpi ne, %1, %c0_i32_0 : i32
    scf.if %2 {
      %cst = arith.constant 0.000000e+00 : f32
      %10 = vector.broadcast %cst : f32 to vector<1x8x128xf32>
      %c0 = arith.constant 0 : index
      %c0_3 = arith.constant 0 : index
      %c0_4 = arith.constant 0 : index
      %11 = vector.load %arg4[%c0, %c0_3, %c0_4] : memref<1x8x128xf32, #tpu.memory_space<vmem>>, vector<1x8x128xf32>
      tpu.vector_store %arg4[%c0, %c0_3, %c0_4], %10 {strides = array<i32>} : memref<1x8x128xf32, #tpu.memory_space<vmem>>, vector<1x8x128xf32>,
    } else {
    }
    %c64_i32 = arith.constant 64 : i32
    %3 = arith.muli %arg0, %c64_i32 : i32
    %c1_i32 = arith.constant 1 : i32
    %4 = arith.addi %arg1, %c1_i32 : i32
    %c128_i32 = arith.constant 128 : i32
    %5 = arith.muli %4, %c128_i32 : i32
    %c1_i32_1 = arith.constant 1 : i32
    %6 = arith.subi %5, %c1_i32_1 : i32
    %7 = arith.cmpi sgt, %6, %3 : i32
    %8 = arith.extui %7 : i1 to i32
    %c0_i32_2 = arith.constant 0 : i32
    %9 = arith.cmpi ne, %8, %c0_i32_2 : i32
    scf.if %9 {
      %c0 = arith.constant 0 : index
      %c0_3 = arith.constant 0 : index
      %10 = vector.load %arg2[%c0, %c0_3] : memref<64x3xf32, #tpu.memory_space<vmem>>, vector<64x3xf32>
      %c0_4 = arith.constant 0 : index
      %c0_5 = arith.constant 0 : index
      %11 = vector.load %arg3[%c0_4, %c0_5] : memref<3x128xf32, #tpu.memory_space<vmem>>, vector<3x128xf32>
      %12 = vector.extract_strided_slice %10 {offsets = [0, 0], sizes = [64, 1], strides = [1, 1]} : vector<64x3xf32> to vector<64x1xf32>
      %13 = vector.extract_strided_slice %11 {offsets = [0, 0], sizes = [1, 128], strides = [1, 1]} : vector<3x128xf32> to vector<1x128xf32>
      %14 = vector.broadcast %12 : vector<64x1xf32> to vector<64x128xf32>
      %15 = vector.broadcast %13 : vector<1x128xf32> to vector<64x128xf32>
      %16 = arith.subf %14, %15 : vector<64x128xf32>
      %17 = vector.extract_strided_slice %10 {offsets = [0, 1], sizes = [64, 1], strides = [1, 1]} : vector<64x3xf32> to vector<64x1xf32>
      %18 = vector.extract_strided_slice %11 {offsets = [1, 0], sizes = [1, 128], strides = [1, 1]} : vector<3x128xf32> to vector<1x128xf32>
      %19 = vector.broadcast %17 : vector<64x1xf32> to vector<64x128xf32>
      %20 = vector.broadcast %18 : vector<1x128xf32> to vector<64x128xf32>
      %21 = arith.subf %19, %20 : vector<64x128xf32>
      %22 = vector.extract_strided_slice %10 {offsets = [0, 2], sizes = [64, 1], strides = [1, 1]} : vector<64x3xf32> to vector<64x1xf32>
      %23 = vector.extract_strided_slice %11 {offsets = [2, 0], sizes = [1, 128], strides = [1, 1]} : vector<3x128xf32> to vector<1x128xf32>
      %24 = vector.broadcast %22 : vector<64x1xf32> to vector<64x128xf32>
      %25 = vector.broadcast %23 : vector<1x128xf32> to vector<64x128xf32>
      %26 = arith.subf %24, %25 : vector<64x128xf32>
      %27 = arith.mulf %16, %16 : vector<64x128xf32>
      %28 = arith.mulf %21, %21 : vector<64x128xf32>
      %29 = arith.addf %27, %28 : vector<64x128xf32>
      %30 = arith.mulf %26, %26 : vector<64x128xf32>
      %31 = arith.addf %29, %30 : vector<64x128xf32>
      %32 = tpu.iota {dimensions = array<i32: 0>} : vector<64x128xi32>
      %33 = vector.broadcast %3 : i32 to vector<64x128xi32>
      %34 = arith.addi %33, %32 : vector<64x128xi32>
      %c128_i32_6 = arith.constant 128 : i32
      %35 = arith.muli %arg1, %c128_i32_6 : i32
      %36 = tpu.iota {dimensions = array<i32: 1>} : vector<64x128xi32>
      %37 = vector.broadcast %35 : i32 to vector<64x128xi32>
      %38 = arith.addi %37, %36 : vector<64x128xi32>
      %39 = arith.cmpi sgt, %38, %34 : vector<64x128xi32>
      %c64_i32_7 = arith.constant 64 : i32
      %40 = vector.broadcast %c64_i32_7 : i32 to vector<64x128xi32>
      %41 = arith.cmpi slt, %34, %40 : vector<64x128xi32>
      %42 = arith.andi %39, %41 : vector<64x128xi1>
      %c64_i32_8 = arith.constant 64 : i32
      %43 = vector.broadcast %c64_i32_8 : i32 to vector<64x128xi32>
      %44 = arith.cmpi slt, %38, %43 : vector<64x128xi32>
      %45 = arith.andi %42, %44 : vector<64x128xi1>
      %cst = arith.constant 9.99999997E-7 : f32
      %46 = vector.broadcast %cst : f32 to vector<64x128xf32>
      %47 = arith.addf %31, %46 : vector<64x128xf32>
      %48 = tpu.reciprocal %47 {approx = true} : vector<64x128xf32> -> vector<64x128xf32>
      %cst_9 = arith.constant 0.000000e+00 : f32
      %49 = vector.broadcast %cst_9 : f32 to vector<64x128xf32>
      %50 = arith.select %45, %48, %49 : vector<64x128xi1>, vector<64x128xf32>
      %51 = vector.extract_strided_slice %50 {offsets = [0, 0], sizes = [8, 128], strides = [1, 1]} : vector<64x128xf32> to vector<8x128xf32>
      %52 = vector.extract_strided_slice %50 {offsets = [8, 0], sizes = [8, 128], strides = [1, 1]} : vector<64x128xf32> to vector<8x128xf32>
      %53 = arith.addf %51, %52 : vector<8x128xf32>
      %54 = vector.extract_strided_slice %50 {offsets = [16, 0], sizes = [8, 128], strides = [1, 1]} : vector<64x128xf32> to vector<8x128xf32>
      %55 = arith.addf %53, %54 : vector<8x128xf32>
      %56 = vector.extract_strided_slice %50 {offsets = [24, 0], sizes = [8, 128], strides = [1, 1]} : vector<64x128xf32> to vector<8x128xf32>
      %57 = arith.addf %55, %56 : vector<8x128xf32>
      %58 = vector.extract_strided_slice %50 {offsets = [32, 0], sizes = [8, 128], strides = [1, 1]} : vector<64x128xf32> to vector<8x128xf32>
      %59 = arith.addf %57, %58 : vector<8x128xf32>
      %60 = vector.extract_strided_slice %50 {offsets = [40, 0], sizes = [8, 128], strides = [1, 1]} : vector<64x128xf32> to vector<8x128xf32>
      %61 = arith.addf %59, %60 : vector<8x128xf32>
      %62 = vector.extract_strided_slice %50 {offsets = [48, 0], sizes = [8, 128], strides = [1, 1]} : vector<64x128xf32> to vector<8x128xf32>
      %63 = arith.addf %61, %62 : vector<8x128xf32>
      %64 = vector.extract_strided_slice %50 {offsets = [56, 0], sizes = [8, 128], strides = [1, 1]} : vector<64x128xf32> to vector<8x128xf32>
      %65 = arith.addf %63, %64 : vector<8x128xf32>
      %c0_10 = arith.constant 0 : index
      %c0_11 = arith.constant 0 : index
      %c0_12 = arith.constant 0 : index
      %66 = vector.load %arg4[%c0_10, %c0_11, %c0_12] : memref<1x8x128xf32, #tpu.memory_space<vmem>>, vector<1x8x128xf32>
      %67 = vector.shape_cast %66 : vector<1x8x128xf32> to vector<8x128xf32>
      %68 = arith.addf %67, %65 : vector<8x128xf32>
      %c0_13 = arith.constant 0 : index
      %c0_14 = arith.constant 0 : index
      %c0_15 = arith.constant 0 : index
      %69 = vector.load %arg4[%c0_13, %c0_14, %c0_15] : memref<1x8x128xf32, #tpu.memory_space<vmem>>, vector<1x8x128xf32>
      %70 = vector.shape_cast %69 : vector<1x8x128xf32> to vector<8x128xf32>
      %71 = vector.shape_cast %68 : vector<8x128xf32> to vector<1x8x128xf32>
      tpu.vector_store %arg4[%c0_13, %c0_14, %c0_15], %71 {strides = array<i32>} : memref<1x8x128xf32, #tpu.memory_space<vmem>>, vector<1x8x128xf32>,
    } else {
    }
    return
  }
  func.func @transform_0(%arg0: i32, %arg1: i32) -> (i32, i32) {
    %c0_i32 = arith.constant 0 : i32
    %c0_i32_0 = arith.constant 0 : i32
    return %arg0, %c0_i32 : i32, i32
  }
  func.func @transform_1(%arg0: i32, %arg1: i32) -> (i32, i32) {
    %c0_i32 = arith.constant 0 : i32
    %c0_i32_0 = arith.constant 0 : i32
    return %c0_i32, %arg1 : i32, i32
  }
  func.func @transform_2(%arg0: i32, %arg1: i32) -> (i32, i32, i32) {
    %c0_i32 = arith.constant 0 : i32
    %c0_i32_0 = arith.constant 0 : i32
    %c0_i32_1 = arith.constant 0 : i32
    return %arg0, %c0_i32, %c0_i32_0 : i32, i32, i32
  }
}

</mosaic_0001>

<llo_original>
// kernel: tpu_custom_call.1
$region0: #{tpu_custom_call.1}
  #allocation0 [shape = 'u32[]', space=smem, size = 0x4, offset = 0x4, fixed_abs, tag = 'smem constant byte address 0x4 - core index']
  #allocation1 [shape = 'u32[144,128]{1,0:T(1,128)}', space=vmem, size = 0x12000, scoped, tag = 'internal scratch']
  %s0 = inlined_call_operand.vmem [shape: f32[64,3], index: 0, kind: input, shape index: {}]
  %s1 = inlined_call_operand.vmem [shape: f32[3,128], index: 1, kind: input, shape index: {}]
  %s2 = inlined_call_operand.hbm [shape: f32[1,8,128], index: 2, kind: output, shape index: {}]
  %s3 = sld [smem:[#allocation0]]
  $region26: #{tpu_custom_call.1} parent=0
    _
  %s5 = ssub.s32 1, %s3
  %s6 = scalar_select 0, %s5, %s3
  $region1: #{tpu_custom_call.1} parent=0
    #allocation2 [shape = 'u8[4096]{0}', space=vmem, size = 0x1000, scoped, tag = 'output window, operand 0, single buffered']
    #allocation3 [shape = 's32[1]{0}', space=sflag, size = 0x4, scoped, tag = 'scoped memory for tpu_custom_call.1']
    %7 = vsyncpa [#allocation3], 0
    // Predicated region
    $region2: #{tpu_custom_call.1} parent=1 // pred_check
      _
    $region3: #{tpu_custom_call.1} parent=1 // pred_check_branch
      %9 = sbr.rel (0) target = $region5
    $region4: #{tpu_custom_call.1} parent=1 // pred_region
      _
    $region5: #{tpu_custom_call.1} parent=1 // pred_fallthru
      _
    // Predicated region
    $region6: #{tpu_custom_call.1} parent=1 // pred_check
      _
    $region7: #{tpu_custom_call.1} parent=1 // pred_check_branch
      %11 = sbr.rel (0) target = $region9
    $region8: #{tpu_custom_call.1} parent=1 // pred_region
      _
    $region9: #{tpu_custom_call.1} parent=1 // pred_fallthru
      _
    %p12 = scmp.eq.s32.totalorder 0, 0
    // Predicated region
    $region10: #{tpu_custom_call.1} parent=1 // pred_check
      %p13 = pneg %p12
    $region11: #{tpu_custom_call.1} parent=1 // pred_check_branch
      %15 = sbr.rel (%p13) target = $region13
    $region12: #{tpu_custom_call.1} parent=1 // pred_region
      %16 = vst [vmem:[#allocation2] sm:$0xff] 0.0
    $region13: #{tpu_custom_call.1} parent=1 // pred_fallthru
      _
    %s17 = smul.u32 0, 64
    %s18 = sadd.s32 0, 1
    %s19 = smul.u32 %s18, 128
    %s20 = ssub.s32 %s19, 1
    %p21 = scmp.gt.s32.totalorder %s20, %s17
    // Predicated region
    $region14: #{tpu_custom_call.1} parent=1 // pred_check
      %p22 = pneg %p21
    $region15: #{tpu_custom_call.1} parent=1 // pred_check_branch
      %24 = sbr.rel (%p22) target = $region17
    $region16: #{tpu_custom_call.1} parent=1 // pred_region
      %v25 = vld [vmem:[%s0] sm:$0xff]
      %v26 = vld [vmem:[%s0 + $0x8] sm:$0xff]
      %v27 = vld [vmem:[%s0 + $0x10] sm:$0xff]
      %v28 = vld [vmem:[%s0 + $0x18] sm:$0xff]
      %v29 = vld [vmem:[%s0 + $0x20] sm:$0xff]
      %v30 = vld [vmem:[%s0 + $0x28] sm:$0xff]
      %v31 = vld [vmem:[%s0 + $0x30] sm:$0xff]
      %v32 = vld [vmem:[%s0 + $0x38] sm:$0xff]
      %v33 = vld [vmem:[%s1] sm:$0x7]
      %35 = vset.pattern.permute.xlu0 0
      %36 = vperm.xlu0 %35, %v25
      %v37 = vpop.permute.xlu0 %36
      %40 = vset.pattern.permute.xlu0 0
      %41 = vperm.xlu0 %40, %v26
      %v42 = vpop.permute.xlu0 %41
      %45 = vset.pattern.permute.xlu0 0
      %46 = vperm.xlu0 %45, %v27
      %v47 = vpop.permute.xlu0 %46
      %50 = vset.pattern.permute.xlu0 0
      %51 = vperm.xlu0 %50, %v28
      %v52 = vpop.permute.xlu0 %51
      %55 = vset.pattern.permute.xlu0 0
      %56 = vperm.xlu0 %55, %v29
      %v57 = vpop.permute.xlu0 %56
      %60 = vset.pattern.permute.xlu0 0
      %61 = vperm.xlu0 %60, %v30
      %v62 = vpop.permute.xlu0 %61
      %65 = vset.pattern.permute.xlu0 0
      %66 = vperm.xlu0 %65, %v31
      %v67 = vpop.permute.xlu0 %66
      %70 = vset.pattern.permute.xlu0 0
      %71 = vperm.xlu0 %70, %v32
      %v72 = vpop.permute.xlu0 %71
      %v74 = vlaneseq
      %v75 = vshrl.u32 %v74, 7
      %v76 = vsub.s32 0, %v75
      %v77 = vrot.slane %v33, %v76
      %v78 = vsub.f32 %v37, %v77
      %v79 = vsub.f32 %v42, %v77
      %v80 = vsub.f32 %v47, %v77
      %v81 = vsub.f32 %v52, %v77
      %v82 = vsub.f32 %v57, %v77
      %v83 = vsub.f32 %v62, %v77
      %v84 = vsub.f32 %v67, %v77
      %v85 = vsub.f32 %v72, %v77
      %86 = vset.pattern.permute.xlu0 1
      %87 = vperm.xlu0 %86, %v25
      %v88 = vpop.permute.xlu0 %87
      %90 = vset.pattern.permute.xlu0 1
      %91 = vperm.xlu0 %90, %v26
      %v92 = vpop.permute.xlu0 %91
      %94 = vset.pattern.permute.xlu0 1
      %95 = vperm.xlu0 %94, %v27
      %v96 = vpop.permute.xlu0 %95
      %98 = vset.pattern.permute.xlu0 1
      %99 = vperm.xlu0 %98, %v28
      %v100 = vpop.permute.xlu0 %99
      %102 = vset.pattern.permute.xlu0 1
      %103 = vperm.xlu0 %102, %v29
      %v104 = vpop.permute.xlu0 %103
      %106 = vset.pattern.permute.xlu0 1
      %107 = vperm.xlu0 %106, %v30
      %v108 = vpop.permute.xlu0 %107
      %110 = vset.pattern.permute.xlu0 1
      %111 = vperm.xlu0 %110, %v31
      %v112 = vpop.permute.xlu0 %111
      %114 = vset.pattern.permute.xlu0 1
      %115 = vperm.xlu0 %114, %v32
      %v116 = vpop.permute.xlu0 %115
      %v118 = vlaneseq
      %v119 = vshrl.u32 %v118, 7
      %v120 = vsub.s32 1, %v119
      %v121 = vrot.slane %v33, %v120
      %v122 = vsub.f32 %v88, %v121
      %v123 = vsub.f32 %v92, %v121
      %v124 = vsub.f32 %v96, %v121
      %v125 = vsub.f32 %v100, %v121
      %v126 = vsub.f32 %v104, %v121
      %v127 = vsub.f32 %v108, %v121
      %v128 = vsub.f32 %v112, %v121
      %v129 = vsub.f32 %v116, %v121
      %130 = vset.pattern.permute.xlu0 2
      %131 = vperm.xlu0 %130, %v25
      %v132 = vpop.permute.xlu0 %131
      %134 = vset.pattern.permute.xlu0 2
      %135 = vperm.xlu0 %134, %v26
      %v136 = vpop.permute.xlu0 %135
      %138 = vset.pattern.permute.xlu0 2
      %139 = vperm.xlu0 %138, %v27
      %v140 = vpop.permute.xlu0 %139
      %142 = vset.pattern.permute.xlu0 2
      %143 = vperm.xlu0 %142, %v28
      %v144 = vpop.permute.xlu0 %143
      %146 = vset.pattern.permute.xlu0 2
      %147 = vperm.xlu0 %146, %v29
      %v148 = vpop.permute.xlu0 %147
      %150 = vset.pattern.permute.xlu0 2
      %151 = vperm.xlu0 %150, %v30
      %v152 = vpop.permute.xlu0 %151
      %154 = vset.pattern.permute.xlu0 2
      %155 = vperm.xlu0 %154, %v31
      %v156 = vpop.permute.xlu0 %155
      %158 = vset.pattern.permute.xlu0 2
      %159 = vperm.xlu0 %158, %v32
      %v160 = vpop.permute.xlu0 %159
      %v162 = vlaneseq
      %v163 = vshrl.u32 %v162, 7
      %v164 = vsub.s32 2, %v163
      %v165 = vrot.slane %v33, %v164
      %v166 = vsub.f32 %v132, %v165
      %v167 = vsub.f32 %v136, %v165
      %v168 = vsub.f32 %v140, %v165
      %v169 = vsub.f32 %v144, %v165
      %v170 = vsub.f32 %v148, %v165
      %v171 = vsub.f32 %v152, %v165
      %v172 = vsub.f32 %v156, %v165
      %v173 = vsub.f32 %v160, %v165
      %v174 = vmul.f32 %v78, %v78
      %v175 = vmul.f32 %v79, %v79
      %v176 = vmul.f32 %v80, %v80
      %v177 = vmul.f32 %v81, %v81
      %v178 = vmul.f32 %v82, %v82
      %v179 = vmul.f32 %v83, %v83
      %v180 = vmul.f32 %v84, %v84
      %v181 = vmul.f32 %v85, %v85
      %v182 = vmul.f32 %v122, %v122
      %v183 = vmul.f32 %v123, %v123
      %v184 = vmul.f32 %v124, %v124
      %v185 = vmul.f32 %v125, %v125
      %v186 = vmul.f32 %v126, %v126
      %v187 = vmul.f32 %v127, %v127
      %v188 = vmul.f32 %v128, %v128
      %v189 = vmul.f32 %v129, %v129
      %v190 = vadd.f32 %v174, %v182
      %v191 = vadd.f32 %v175, %v183
      %v192 = vadd.f32 %v176, %v184
      %v193 = vadd.f32 %v177, %v185
      %v194 = vadd.f32 %v178, %v186
      %v195 = vadd.f32 %v179, %v187
      %v196 = vadd.f32 %v180, %v188
      %v197 = vadd.f32 %v181, %v189
      %v198 = vmul.f32 %v166, %v166
      %v199 = vmul.f32 %v167, %v167
      %v200 = vmul.f32 %v168, %v168
      %v201 = vmul.f32 %v169, %v169
      %v202 = vmul.f32 %v170, %v170
      %v203 = vmul.f32 %v171, %v171
      %v204 = vmul.f32 %v172, %v172
      %v205 = vmul.f32 %v173, %v173
      %v206 = vadd.f32 %v190, %v198
      %v207 = vadd.f32 %v191, %v199
      %v208 = vadd.f32 %v192, %v200
      %v209 = vadd.f32 %v193, %v201
      %v210 = vadd.f32 %v194, %v202
      %v211 = vadd.f32 %v195, %v203
      %v212 = vadd.f32 %v196, %v204
      %v213 = vadd.f32 %v197, %v205
      %v214 = vlaneseq
      %v215 = vshrl.u32 %v214, 7
      %v216 = vadd.s32 %v215, 8
      %v217 = vadd.s32 %v215, 16
      %v218 = vadd.s32 %v215, 24
      %v219 = vadd.s32 %v215, 32
      %v220 = vadd.s32 %v215, 40
      %v221 = vadd.s32 %v215, 48
      %v222 = vadd.s32 %v215, 56
      %v223 = vstv %s17
      %v224 = vadd.s32 %v223, %v215
      %v225 = vadd.s32 %v223, %v216
      %v226 = vadd.s32 %v223, %v217
      %v227 = vadd.s32 %v223, %v218
      %v228 = vadd.s32 %v223, %v219
      %v229 = vadd.s32 %v223, %v220
      %v230 = vadd.s32 %v223, %v221
      %v231 = vadd.s32 %v223, %v222
      %s232 = smul.u32 0, 128
      %v233 = vlaneseq
      %v234 = vand.u32 %v233, 127
      %v235 = vstv %s232
      %v236 = vadd.s32 %v235, %v234
      %vm237 = vcmp.gt.s32.totalorder %v236, %v224
      %vm238 = vcmp.gt.s32.totalorder %v236, %v225
      %vm239 = vcmp.gt.s32.totalorder %v236, %v226
      %vm240 = vcmp.gt.s32.totalorder %v236, %v227
      %vm241 = vcmp.gt.s32.totalorder %v236, %v228
      %vm242 = vcmp.gt.s32.totalorder %v236, %v229
      %vm243 = vcmp.gt.s32.totalorder %v236, %v230
      %vm244 = vcmp.gt.s32.totalorder %v236, %v231
      %vm245 = vcmp.lt.s32.totalorder %v224, 64
      %vm246 = vcmp.lt.s32.totalorder %v225, 64
      %vm247 = vcmp.lt.s32.totalorder %v226, 64
      %vm248 = vcmp.lt.s32.totalorder %v227, 64
      %vm249 = vcmp.lt.s32.totalorder %v228, 64
      %vm250 = vcmp.lt.s32.totalorder %v229, 64
      %vm251 = vcmp.lt.s32.totalorder %v230, 64
      %vm252 = vcmp.lt.s32.totalorder %v231, 64
      %vm253 = vmand %vm237, %vm245
      %vm254 = vmand %vm238, %vm246
      %vm255 = vmand %vm239, %vm247
      %vm256 = vmand %vm240, %vm248
      %vm257 = vmand %vm241, %vm249
      %vm258 = vmand %vm242, %vm250
      %vm259 = vmand %vm243, %vm251
      %vm260 = vmand %vm244, %vm252
      %vm261 = vcmp.lt.s32.totalorder %v236, 64
      %vm262 = vmand %vm253, %vm261
      %vm263 = vmand %vm254, %vm261
      %vm264 = vmand %vm255, %vm261
      %vm265 = vmand %vm256, %vm261
      %vm266 = vmand %vm257, %vm261
      %vm267 = vmand %vm258, %vm261
      %vm268 = vmand %vm259, %vm261
      %vm269 = vmand %vm260, %vm261
      %v270 = vadd.f32 %v206, 1e-06
      %v271 = vadd.f32 %v207, 1e-06
      %v272 = vadd.f32 %v208, 1e-06
      %v273 = vadd.f32 %v209, 1e-06
      %v274 = vadd.f32 %v210, 1e-06
      %v275 = vadd.f32 %v211, 1e-06
      %v276 = vadd.f32 %v212, 1e-06
      %v277 = vadd.f32 %v213, 1e-06
      %v278 = vrcp.pop %v270
      %v279 = vrcp.pop %v271
      %v280 = vrcp.pop %v272
      %v281 = vrcp.pop %v273
      %v282 = vrcp.pop %v274
      %v283 = vrcp.pop %v275
      %v284 = vrcp.pop %v276
      %v285 = vrcp.pop %v277
      %v286 = vsel %vm262, %v278, 0.0
      %v287 = vsel %vm263, %v279, 0.0
      %v288 = vsel %vm264, %v280, 0.0
      %v289 = vsel %vm265, %v281, 0.0
      %v290 = vsel %vm266, %v282, 0.0
      %v291 = vsel %vm267, %v283, 0.0
      %v292 = vsel %vm268, %v284, 0.0
      %v293 = vsel %vm269, %v285, 0.0
      %v294 = vadd.f32 %v286, %v287
      %v295 = vadd.f32 %v294, %v288
      %v296 = vadd.f32 %v295, %v289
      %v297 = vadd.f32 %v296, %v290
      %v298 = vadd.f32 %v297, %v291
      %v299 = vadd.f32 %v298, %v292
      %v300 = vadd.f32 %v299, %v293
      %v301 = vld [vmem:[#allocation2] sm:$0xff]
      %v302 = vadd.f32 %v301, %v300
      %303 = vst [vmem:[#allocation2] sm:$0xff] %v302
    $region17: #{tpu_custom_call.1} parent=1 // pred_fallthru
      _
    // Predicated region
    $region18: #{tpu_custom_call.1} parent=1 // pred_check
      _
    $region19: #{tpu_custom_call.1} parent=1 // pred_check_branch
      %305 = sbr.rel (0) target = $region21
    $region20: #{tpu_custom_call.1} parent=1 // pred_region
      %s307 = ssub.s32 128, 128
      %308 = vsyncadd [#allocation3], %s307
      %s310 = sshll.u32 [#allocation2], 4
      %s311 = int_to_ptr.vmem [resolvable:$true] %s310
      %313 = dma.vmem_to_hbm [thread:$0]  %s311, 128, %s2, [#allocation3]
    $region21: #{tpu_custom_call.1} parent=1 // pred_fallthru
      _
    // Predicated region
    $region22: #{tpu_custom_call.1} parent=1 // pred_check
      _
    $region23: #{tpu_custom_call.1} parent=1 // pred_check_branch
      %315 = sbr.rel (0) target = $region25
    $region24: #{tpu_custom_call.1} parent=1 // pred_region
      %316 = dma.done [#allocation3], 128
    $region25: #{tpu_custom_call.1} parent=1 // pred_fallthru
      _
    %317 = vsyncpa [#allocation3], 1

</llo_original>
